<compile_context>
chip_gen: v5e
topology: v5e:2x2
jax: 0.10.0
libtpu: 0.0.40
codegen_flags: <defaults>
</compile_context>

<pallas_src>
import functools
import math

import jax
import jax.numpy as jnp
from jax.experimental import pallas as pl
from jax.experimental.pallas import tpu as pltpu


def _round_up(x, m):
    return ((x + m - 1) // m) * m


def _round_down(x, m):
    return max(m, (x // m) * m)


def _qknorm_kernel(q_ref, k_ref, red_ref, qo_ref, ko_ref, *, eps, inv_d):
    # Per-segment sum of squares via a (block-diagonal-)ones matmul on the
    # otherwise-idle MXU: the (rows, Dp) result already holds every lane's
    # segment sum, so no XLU row-reduce and no lane re-broadcast are needed.
    red = red_ref[...]
    q = q_ref[...].astype(jnp.float32)
    k = k_ref[...].astype(jnp.float32)
    qs = jax.lax.rsqrt(
        jnp.dot(q * q, red, preferred_element_type=jnp.float32) * inv_d + eps)
    ks = jax.lax.rsqrt(
        jnp.dot(k * k, red, preferred_element_type=jnp.float32) * inv_d + eps)
    qo_ref[...] = (q * qs).astype(qo_ref.dtype)
    ko_ref[...] = (k * ks).astype(ko_ref.dtype)


def _qknorm_trainable_kernel(q_ref, k_ref, red_ref, qw_ref, kw_ref,
                             qo_ref, ko_ref, *, eps, inv_d):
    red = red_ref[...]
    q = q_ref[...].astype(jnp.float32)
    k = k_ref[...].astype(jnp.float32)
    qs = jax.lax.rsqrt(
        jnp.dot(q * q, red, preferred_element_type=jnp.float32) * inv_d + eps)
    ks = jax.lax.rsqrt(
        jnp.dot(k * k, red, preferred_element_type=jnp.float32) * inv_d + eps)
    qo_ref[...] = (q * qs * qw_ref[...]).astype(qo_ref.dtype)
    ko_ref[...] = (k * ks * kw_ref[...]).astype(ko_ref.dtype)


def qk_norm(q, k, query_weight=None, key_weight=None, *, eps=1e-6, rows_tile=None):
    """QKNorm forward: (RMSNorm(q), RMSNorm(k)) with independent norms.

    q, k: arrays of shape [..., D]. If query_weight/key_weight (shape [D]) are
    given, the trainable variant (x * norm * weight) is used.
    """
    assert q.shape == k.shape and q.dtype == k.dtype
    orig_shape = q.shape
    D = orig_shape[-1]
    N = math.prod(orig_shape[:-1])
    itemsize = jnp.dtype(q.dtype).itemsize

    # Lane-dense packing: pack G = 128 // D head vectors side-by-side into one
    # 128-lane row so loads/stores are full, unmasked vregs. N is padded up to
    # a multiple of G; padded zero rows normalize to finite values (rsqrt(eps))
    # and are sliced off below, so no NaNs leak.
    if D <= 128 and 128 % D == 0:
        G = 128 // D
    else:
        # TODO(synk): head dims that do not divide 128 fall back to a
        # (possibly masked) <128-lane-aligned store path.
        G = 1
    Dp = G * D

    q2 = q.reshape(N, D)
    k2 = k.reshape(N, D)
    N_pad = _round_up(N, G)
    if N_pad != N:
        q2 = jnp.pad(q2, ((0, N_pad - N), (0, 0)))
        k2 = jnp.pad(k2, ((0, N_pad - N), (0, 0)))
    Np = N_pad // G
    q2 = q2.reshape(Np, Dp)
    k2 = k2.reshape(Np, Dp)

    # --- Per-generation VMEM budget -----------------------------------------
    try:
        vmem_cap = int(pltpu.get_tpu_info().vmem_capacity_bytes)
    except Exception:  # non-TPU build / interpret mode fallback
        vmem_cap = 64 * 1024 * 1024
    # ~96 MiB on v5e/v6e (128 MiB physical), ~48 MiB on v7x (64 MiB physical).
    vmem_limit = max(32 * 1024 * 1024, min(96 * 1024 * 1024, (vmem_cap * 3) // 4))

    # --- Row tile: dtype-aware, ~1 MiB per stream per step; >= 2 (even) grid
    # steps for pipelining and for both v7x TensorCores ------------------------
    sub = 8 * (4 // min(4, itemsize))          # sublane multiple: 8 f32, 16 bf16
    if rows_tile is None:
        rows_tile = max(sub, (1 << 20) // (Dp * itemsize))
    # Keep 4 streams x 2 buffers x tile comfortably inside the VMEM budget,
    # leaving headroom for the f32 intermediates of the compute path.
    rows_cap = max(sub, (vmem_limit // 3) // (8 * Dp * itemsize))
    rows_tile = min(rows_tile, rows_cap)

    if Np <= max(2 * sub, min(rows_tile, 2048)):
        rt = Np                                # block == full array dim: legal
    else:
        half = _round_up(pl.cdiv(Np, 2), sub)  # guarantees >= 2 grid steps
        rt = min(_round_down(rows_tile, sub), half)
        steps = pl.cdiv(Np, rt)
        if steps > 1 and steps % 2 == 1:       # balance across v7x's two TCs
            rt = _round_up(pl.cdiv(Np, steps + 1), sub)
    grid = (pl.cdiv(Np, rt),)

    # Hoisted segmented-reduce matrix: block-diagonal ones (all-ones when G==1),
    # passed with a constant index_map so it is DMA'd once and stays resident.
    r = jax.lax.broadcasted_iota(jnp.int32, (Dp, Dp), 0) // D
    c = jax.lax.broadcasted_iota(jnp.int32, (Dp, Dp), 1) // D
    reduce_mat = (r == c).astype(jnp.float32)

    row_spec = pl.BlockSpec((rt, Dp), lambda i: (i, 0))
    red_spec = pl.BlockSpec((Dp, Dp), lambda i: (0, 0))
    out_shape = (
        jax.ShapeDtypeStruct((Np, Dp), q.dtype),
        jax.ShapeDtypeStruct((Np, Dp), k.dtype),
    )
    cparams = pltpu.CompilerParams(
        dimension_semantics=("parallel",),
        vmem_limit_bytes=int(vmem_limit),
    )

    # NOTE: the ragged last grid block loads undefined rows beyond Np; this is
    # safe only because every row is independent and Pallas drops the
    # out-of-bounds writeback.
    if query_weight is None:
        qn, kn = pl.pallas_call(
            functools.partial(_qknorm_kernel, eps=eps, inv_d=1.0 / D),
            grid=grid,
            in_specs=[row_spec, row_spec, red_spec],
            out_specs=[row_spec, row_spec],
            out_shape=out_shape,
            compiler_params=cparams,
        )(q2, k2, reduce_mat)
    else:
        # Tile the (D,) weight G times so every packed segment sees it; the
        # constant block index makes it a one-time DMA reused across the grid.
        qw = jnp.tile(query_weight.astype(jnp.float32).reshape(-1), G).reshape(1, Dp)
        kw = jnp.tile(key_weight.astype(jnp.float32).reshape(-1), G).reshape(1, Dp)
        w_spec = pl.BlockSpec((1, Dp), lambda i: (0, 0))
        qn, kn = pl.pallas_call(
            functools.partial(_qknorm_trainable_kernel, eps=eps, inv_d=1.0 / D),
            grid=grid,
            in_specs=[row_spec, row_spec, red_spec, w_spec, w_spec],
            out_specs=[row_spec, row_spec],
            out_shape=out_shape,
            compiler_params=cparams,
        )(q2, k2, reduce_mat, qw, kw)

    qn = qn.reshape(N_pad, D)[:N].reshape(orig_shape)
    kn = kn.reshape(N_pad, D)[:N].reshape(orig_shape)
    return qn, kn


def _rmsnorm_ref(x, weight=None, eps=1e-6):
    x_dtype = x.dtype
    xf = x.astype(jnp.float32)
    norm = jax.lax.rsqrt(jnp.mean(xf * xf, axis=-1, keepdims=True) + eps)
    out = xf * norm
    if weight is not None:
        out = out * weight.astype(jnp.float32)
    return out.astype(x_dtype)


def _check(out, ref, atol, rtol):
    assert out.dtype == ref.dtype
    assert out.shape == ref.shape
    assert jnp.allclose(out.astype(jnp.float32), ref.astype(jnp.float32),
                        atol=atol, rtol=rtol)


if __name__ == "__main__":
    key = jax.random.PRNGKey(0)
    k0, k1, k2, k3, k4, k5 = jax.random.split(key, 6)

    # --- Test 1: small attention shape, D=32 (lane-packed path), bf16 ---------
    shape = (2, 2, 8, 32)
    q = jax.random.normal(k0, shape, dtype=jnp.float32).astype(jnp.bfloat16)
    k = jax.random.normal(k1, shape, dtype=jnp.float32).astype(jnp.bfloat16)

    q_out, k_out = qk_norm(q, k)
    jax.block_until_ready(q_out)
    jax.block_until_ready(k_out)
    _check(q_out, _rmsnorm_ref(q), atol=1e-2, rtol=1e-2)
    _check(k_out, _rmsnorm_ref(k), atol=1e-2, rtol=1e-2)

    # Trainable variant with non-trivial weights.
    dim = shape[-1]
    qw = 0.5 + jax.random.uniform(k2, (dim,), dtype=jnp.float32)
    kw = 0.5 + jax.random.uniform(k3, (dim,), dtype=jnp.float32)
    q_out_t, k_out_t = qk_norm(q, k, qw, kw)
    jax.block_until_ready(q_out_t)
    jax.block_until_ready(k_out_t)
    _check(q_out_t, _rmsnorm_ref(q, qw), atol=1e-2, rtol=1e-2)
    _check(k_out_t, _rmsnorm_ref(k, kw), atol=1e-2, rtol=1e-2)

    # --- Test 2: D=128 (G=1, all-ones MXU reduce), bf16 -----------------------
    shape2 = (1, 2, 16, 128)
    q2 = jax.random.normal(k4, shape2, dtype=jnp.float32).astype(jnp.bfloat16)
    kk2 = jax.random.normal(k5, shape2, dtype=jnp.float32).astype(jnp.bfloat16)
    q2_out, k2_out = qk_norm(q2, kk2)
    jax.block_until_ready(q2_out)
    jax.block_until_ready(k2_out)
    _check(q2_out, _rmsnorm_ref(q2), atol=1e-2, rtol=1e-2)
    _check(k2_out, _rmsnorm_ref(kk2), atol=1e-2, rtol=1e-2)

    # --- Test 3: multi-step ragged grid (Np not divisible by tile), f32, D=64 -
    shape3 = (2, 3, 8, 64)   # N=48 rows, G=2 -> Np=24, rows_tile=16 -> grid=(2,)
    q3 = jax.random.normal(k2, shape3, dtype=jnp.float32)
    k3_ = jax.random.normal(k3, shape3, dtype=jnp.float32)
    q3_out, k3_out = qk_norm(q3, k3_, rows_tile=16)
    jax.block_until_ready(q3_out)
    jax.block_until_ready(k3_out)
    _check(q3_out, _rmsnorm_ref(q3), atol=1e-4, rtol=1e-4)
    _check(k3_out, _rmsnorm_ref(k3_), atol=1e-4, rtol=1e-4)

    # --- Test 4: N not a multiple of the packing factor (padded path), f32 ----
    shape4 = (1, 1, 5, 64)   # N=5, G=2 -> padded to 6 rows, sliced back to 5
    q4 = jax.random.normal(k0, shape4, dtype=jnp.float32)
    k4_ = jax.random.normal(k1, shape4, dtype=jnp.float32)
    q4_out, k4_out = qk_norm(q4, k4_)
    jax.block_until_ready(q4_out)
    jax.block_until_ready(k4_out)
    _check(q4_out, _rmsnorm_ref(q4), atol=1e-4, rtol=1e-4)
    _check(k4_out, _rmsnorm_ref(k4_), atol=1e-4, rtol=1e-4)

    print("KERNEL_OK")
</pallas_src>

<mosaic_0001>
module attributes {stable_mosaic.version = 11 : i64} {
  func.func @_qknorm_kernel(%arg0: i32, %arg1: memref<8x128xbf16, #tpu.memory_space<vmem>>, %arg2: memref<8x128xbf16, #tpu.memory_space<vmem>>, %arg3: memref<128x128xf32, #tpu.memory_space<vmem>>, %arg4: memref<8x128xbf16, #tpu.memory_space<vmem>>, %arg5: memref<8x128xbf16, #tpu.memory_space<vmem>>) attributes {dimension_semantics = [#tpu.dimension_semantics<parallel>], iteration_bounds = array<i64: 1>, scalar_prefetch = 0 : i64, scratch_operands = 0 : i64, tpu.core_type = #tpu.core_type<tc>, window_params = [{transform_indices = @transform_0, window_bounds = array<i64: 8, 128>}, {transform_indices = @transform_1, window_bounds = array<i64: 8, 128>}, {pipeline_mode = #tpu.pipeline_mode<synchronous>, transform_indices = @transform_2, window_bounds = array<i64: 128, 128>}, {transform_indices = @transform_3, window_bounds = array<i64: 8, 128>}, {transform_indices = @transform_4, window_bounds = array<i64: 8, 128>}]} {
    %c0 = arith.constant 0 : index
    %c0_0 = arith.constant 0 : index
    %0 = vector.load %arg3[%c0, %c0_0] : memref<128x128xf32, #tpu.memory_space<vmem>>, vector<128x128xf32>
    %c0_1 = arith.constant 0 : index
    %c0_2 = arith.constant 0 : index
    %1 = vector.load %arg1[%c0_1, %c0_2] : memref<8x128xbf16, #tpu.memory_space<vmem>>, vector<8x128xbf16>
    %2 = arith.extf %1 : vector<8x128xbf16> to vector<8x128xf32>
    %c0_3 = arith.constant 0 : index
    %c0_4 = arith.constant 0 : index
    %3 = vector.load %arg2[%c0_3, %c0_4] : memref<8x128xbf16, #tpu.memory_space<vmem>>, vector<8x128xbf16>
    %4 = arith.extf %3 : vector<8x128xbf16> to vector<8x128xf32>
    %5 = arith.mulf %2, %2 : vector<8x128xf32>
    %cst = arith.constant dense<0.000000e+00> : vector<8x128xf32>
    %6 = tpu.matmul %5, %0, %cst {dimension_numbers = #tpu.dot_dimension_numbers<[1], [0], [0], [1], [0, 0, 1, 1], [], []>} : vector<8x128xf32>, vector<128x128xf32>, vector<8x128xf32> -> vector<8x128xf32>
    %cst_5 = arith.constant 3.125000e-02 : f32
    %7 = vector.broadcast %cst_5 : f32 to vector<8x128xf32>
    %8 = arith.mulf %6, %7 : vector<8x128xf32>
    %cst_6 = arith.constant 9.99999997E-7 : f32
    %9 = vector.broadcast %cst_6 : f32 to vector<8x128xf32>
    %10 = arith.addf %8, %9 : vector<8x128xf32>
    %11 = math.rsqrt %10 : vector<8x128xf32>
    %12 = arith.mulf %4, %4 : vector<8x128xf32>
    %cst_7 = arith.constant dense<0.000000e+00> : vector<8x128xf32>
    %13 = tpu.matmul %12, %0, %cst_7 {dimension_numbers = #tpu.dot_dimension_numbers<[1], [0], [0], [1], [0, 0, 1, 1], [], []>} : vector<8x128xf32>, vector<128x128xf32>, vector<8x128xf32> -> vector<8x128xf32>
    %cst_8 = arith.constant 3.125000e-02 : f32
    %14 = vector.broadcast %cst_8 : f32 to vector<8x128xf32>
    %15 = arith.mulf %13, %14 : vector<8x128xf32>
    %cst_9 = arith.constant 9.99999997E-7 : f32
    %16 = vector.broadcast %cst_9 : f32 to vector<8x128xf32>
    %17 = arith.addf %15, %16 : vector<8x128xf32>
    %18 = math.rsqrt %17 : vector<8x128xf32>
    %19 = arith.mulf %2, %11 : vector<8x128xf32>
    %20 = arith.truncf %19 : vector<8x128xf32> to vector<8x128xbf16>
    %c0_10 = arith.constant 0 : index
    %c0_11 = arith.constant 0 : index
    %21 = vector.load %arg4[%c0_10, %c0_11] : memref<8x128xbf16, #tpu.memory_space<vmem>>, vector<8x128xbf16>
    tpu.vector_store %arg4[%c0_10, %c0_11], %20 {strides = array<i32>} : memref<8x128xbf16, #tpu.memory_space<vmem>>, vector<8x128xbf16>,
    %22 = arith.mulf %4, %18 : vector<8x128xf32>
    %23 = arith.truncf %22 : vector<8x128xf32> to vector<8x128xbf16>
    %c0_12 = arith.constant 0 : index
    %c0_13 = arith.constant 0 : index
    %24 = vector.load %arg5[%c0_12, %c0_13] : memref<8x128xbf16, #tpu.memory_space<vmem>>, vector<8x128xbf16>
    tpu.vector_store %arg5[%c0_12, %c0_13], %23 {strides = array<i32>} : memref<8x128xbf16, #tpu.memory_space<vmem>>, vector<8x128xbf16>,
    return
  }
  func.func @transform_0(%arg0: i32) -> (i32, i32) {
    %c0_i32 = arith.constant 0 : i32
    %c0_i32_0 = arith.constant 0 : i32
    return %arg0, %c0_i32 : i32, i32
  }
  func.func @transform_1(%arg0: i32) -> (i32, i32) {
    %c0_i32 = arith.constant 0 : i32
    %c0_i32_0 = arith.constant 0 : i32
    return %arg0, %c0_i32 : i32, i32
  }
  func.func @transform_2(%arg0: i32) -> (i32, i32) {
    %c0_i32 = arith.constant 0 : i32
    %c0_i32_0 = arith.constant 0 : i32
    %c0_i32_1 = arith.constant 0 : i32
    return %c0_i32, %c0_i32_0 : i32, i32
  }
  func.func @transform_3(%arg0: i32) -> (i32, i32) {
    %c0_i32 = arith.constant 0 : i32
    %c0_i32_0 = arith.constant 0 : i32
    return %arg0, %c0_i32 : i32, i32
  }
  func.func @transform_4(%arg0: i32) -> (i32, i32) {
    %c0_i32 = arith.constant 0 : i32
    %c0_i32_0 = arith.constant 0 : i32
    return %arg0, %c0_i32 : i32, i32
  }
}

</mosaic_0001>

<llo_original>
// kernel: tpu_custom_call.1
$region0: #{tpu_custom_call.1}
  #allocation0 [shape = 'u32[]', space=smem, size = 0x4, offset = 0x4, fixed_abs, tag = 'smem constant byte address 0x4 - core index']
  #allocation1 [shape = 'u32[72,128]{1,0:T(1,128)}', space=vmem, size = 0x9000, scoped, tag = 'internal scratch']
  %s0 = inlined_call_operand.hbm [shape: bf16[8,128], index: 0, kind: input, shape index: {}]
  %s1 = inlined_call_operand.hbm [shape: bf16[8,128], index: 1, kind: input, shape index: {}]
  %s2 = inlined_call_operand.hbm [shape: f32[128,128], index: 2, kind: input, shape index: {}]
  %s3 = inlined_call_operand.hbm [shape: bf16[8,128], index: 3, kind: output, shape index: {0}]
  %s4 = inlined_call_operand.hbm [shape: bf16[8,128], index: 4, kind: output, shape index: {1}]
  %5 = xla_tuple %s3, %s4
  %s6 = sld [smem:[#allocation0]]
  $region42: #{tpu_custom_call.1} parent=0
    _
  %s8 = ssub.s32 1, %s6
  %s9 = scalar_select 0, %s8, %s6
  $region1: #{tpu_custom_call.1} parent=0
    #allocation2 [shape = 'u8[2048]{0}', space=vmem, size = 0x800, scoped, tag = 'input window, operand 0, single buffered']
    #allocation3 [shape = 's32[1]{0}', space=sflag, size = 0x4, scoped, tag = 'scoped memory for tpu_custom_call.1']
    #allocation4 [shape = 's32[1]{0}', space=sflag, size = 0x4, scoped, tag = 'scoped memory for tpu_custom_call.1']
    #allocation5 [shape = 'u8[2048]{0}', space=vmem, size = 0x800, scoped, tag = 'input window, operand 1, single buffered']
    #allocation6 [shape = 's32[1]{0}', space=sflag, size = 0x4, scoped, tag = 'scoped memory for tpu_custom_call.1']
    #allocation7 [shape = 'u8[65536]{0}', space=vmem, size = 0x10000, scoped, tag = 'input window, operand 2, single buffered']
    #allocation8 [shape = 'u8[2048]{0}', space=vmem, size = 0x800, scoped, tag = 'output window, operand 0, single buffered']
    #allocation9 [shape = 'u8[2048]{0}', space=vmem, size = 0x800, scoped, tag = 'output window, operand 1, single buffered']
    #allocation10 [shape = 's32[1]{0}', space=sflag, size = 0x4, scoped, tag = 'scoped memory for tpu_custom_call.1']
    %10 = vsyncpa [#allocation3], 0
    %11 = vsyncpa [#allocation6], 0
    %12 = vsyncpa [#allocation4], 0
    %13 = vsyncpa [#allocation10], 0
    // Predicated region
    $region2: #{tpu_custom_call.1} parent=1 // pred_check
      _
    $region3: #{tpu_custom_call.1} parent=1 // pred_check_branch
      %15 = sbr.rel (0) target = $region5
    $region4: #{tpu_custom_call.1} parent=1 // pred_region
      %17 = vsyncadd [#allocation3], 0
      %s19 = sshll.u32 %s0, 4
      %s20 = int_to_ptr.hbm [resolvable:$true] %s19
      %s21 = sshll.u32 [#allocation2], 4
      %s22 = int_to_ptr.vmem [resolvable:$true] %s21
      %24 = dma.hbm_to_vmem [thread:$0]  %s20, 64, %s22, [#allocation3]
    $region5: #{tpu_custom_call.1} parent=1 // pred_fallthru
      _
    // Predicated region
    $region6: #{tpu_custom_call.1} parent=1 // pred_check
      _
    $region7: #{tpu_custom_call.1} parent=1 // pred_check_branch
      %26 = sbr.rel (0) target = $region9
    $region8: #{tpu_custom_call.1} parent=1 // pred_region
      %28 = vsyncadd [#allocation6], 0
      %s30 = sshll.u32 %s1, 4
      %s31 = int_to_ptr.hbm [resolvable:$true] %s30
      %s32 = sshll.u32 [#allocation5], 4
      %s33 = int_to_ptr.vmem [resolvable:$true] %s32
      %35 = dma.hbm_to_vmem [thread:$0]  %s31, 64, %s33, [#allocation6]
    $region9: #{tpu_custom_call.1} parent=1 // pred_fallthru
      _
    // Predicated region
    $region10: #{tpu_custom_call.1} parent=1 // pred_check
      _
    $region11: #{tpu_custom_call.1} parent=1 // pred_check_branch
      %37 = sbr.rel (0) target = $region13
    $region12: #{tpu_custom_call.1} parent=1 // pred_region
      %39 = vsyncadd [#allocation6], 0
      %s40 = sshll.u32 %s2, 4
      %s41 = int_to_ptr.hbm [resolvable:$true] %s40
      %s42 = sshll.u32 [#allocation7], 4
      %s43 = int_to_ptr.vmem [resolvable:$true] %s42
      %48 = dma.hbm_to_vmem [thread:$0]  %s41, 2048, %s43, [#allocation6], 128, 128, 8
    $region13: #{tpu_custom_call.1} parent=1 // pred_fallthru
      _
    // Predicated region
    $region14: #{tpu_custom_call.1} parent=1 // pred_check
      _
    $region15: #{tpu_custom_call.1} parent=1 // pred_check_branch
      %50 = sbr.rel (0) target = $region17
    $region16: #{tpu_custom_call.1} parent=1 // pred_region
      %52 = dma.done [#allocation3], 64
    $region17: #{tpu_custom_call.1} parent=1 // pred_fallthru
      _
    // Predicated region
    $region18: #{tpu_custom_call.1} parent=1 // pred_check
      _
    $region19: #{tpu_custom_call.1} parent=1 // pred_check_branch
      %54 = sbr.rel (0) target = $region21
    $region20: #{tpu_custom_call.1} parent=1 // pred_region
      %56 = dma.done [#allocation6], 64
    $region21: #{tpu_custom_call.1} parent=1 // pred_fallthru
      _
    // Predicated region
    $region22: #{tpu_custom_call.1} parent=1 // pred_check
      _
    $region23: #{tpu_custom_call.1} parent=1 // pred_check_branch
      %58 = sbr.rel (0) target = $region25
    $region24: #{tpu_custom_call.1} parent=1 // pred_region
      %60 = dma.done [#allocation6], 2048
    $region25: #{tpu_custom_call.1} parent=1 // pred_fallthru
      _
    %v61 = vld [vmem:[#allocation7] sm:$0xff]
    %v62 = vld [vmem:[#allocation7 + $0x8] sm:$0xff]
    %v63 = vld [vmem:[#allocation7 + $0x10] sm:$0xff]
    %v64 = vld [vmem:[#allocation7 + $0x18] sm:$0xff]
    %v65 = vld [vmem:[#allocation7 + $0x20] sm:$0xff]
    %v66 = vld [vmem:[#allocation7 + $0x28] sm:$0xff]
    %v67 = vld [vmem:[#allocation7 + $0x30] sm:$0xff]
    %v68 = vld [vmem:[#allocation7 + $0x38] sm:$0xff]
    %v69 = vld [vmem:[#allocation7 + $0x40] sm:$0xff]
    %v70 = vld [vmem:[#allocation7 + $0x48] sm:$0xff]
    %v71 = vld [vmem:[#allocation7 + $0x50] sm:$0xff]
    %v72 = vld [vmem:[#allocation7 + $0x58] sm:$0xff]
    %v73 = vld [vmem:[#allocation7 + $0x60] sm:$0xff]
    %v74 = vld [vmem:[#allocation7 + $0x68] sm:$0xff]
    %v75 = vld [vmem:[#allocation7 + $0x70] sm:$0xff]
    %v76 = vld [vmem:[#allocation7 + $0x78] sm:$0xff]
    %v77 = vld [vmem:[#allocation2] sm:$0xf]
    %v78 = vunpack.c.l.bf16 %v77
    %v79 = vld [vmem:[#allocation5] sm:$0xf]
    %v80 = vunpack.c.l.bf16 %v79
    %v81 = vmul.f32 %v78, %v78
    %82 = vmatpush.msra.mxu0 %v76
    %83 = vmatpush.msra.mxu0 %v75
    %84 = vmatpush.msra.mxu0 %v74
    %85 = vmatpush.msra.mxu0 %v73
    %86 = vmatpush.msra.mxu0 %v72
    %87 = vmatpush.msra.mxu0 %v71
    %88 = vmatpush.msra.mxu0 %v70
    %89 = vmatpush.msra.mxu0 %v69
    %90 = vmatpush.msra.mxu0 %v68
    %91 = vmatpush.msra.mxu0 %v67
    %92 = vmatpush.msra.mxu0 %v66
    %93 = vmatpush.msra.mxu0 %v65
    %94 = vmatpush.msra.mxu0 %v64
    %95 = vmatpush.msra.mxu0 %v63
    %96 = vmatpush.msra.mxu0 %v62
    %97 = vmatpush.msra.mxu0 %v61
    %98 = vmatmul.f32.gmra.mxu0 %v81
    %v99 = vpop.f32.mrf.mxu0
    %v100 = vadd.f32 0.0, %v99
    %101 = vdwg.mxu0
    %v102 = vmul.f32 %v100, 0.03125
    %v103 = vadd.f32 %v102, 1e-06
    %v104 = vrsqrt.pop %v103
    %v105 = vmul.f32 %v104, %v103
    %v106 = vmul.f32 %v105, %v104
    %v107 = vmul.f32 0.5, %v106
    %v108 = vsub.f32 1.5, %v107
    %v109 = vmul.f32 %v104, %v108
    %vm110 = vweird.f32 %v103
    %vm111 = vweird.f32 %v104
    %vm112 = vmor %vm110, %vm111
    %v113 = vsel %vm112, %v104, %v109
    %v114 = vmul.f32 %v80, %v80
    %115 = vmatpush.msra.mxu0 %v76
    %116 = vmatpush.msra.mxu0 %v75
    %117 = vmatpush.msra.mxu0 %v74
    %118 = vmatpush.msra.mxu0 %v73
    %119 = vmatpush.msra.mxu0 %v72
    %120 = vmatpush.msra.mxu0 %v71
    %121 = vmatpush.msra.mxu0 %v70
    %122 = vmatpush.msra.mxu0 %v69
    %123 = vmatpush.msra.mxu0 %v68
    %124 = vmatpush.msra.mxu0 %v67
    %125 = vmatpush.msra.mxu0 %v66
    %126 = vmatpush.msra.mxu0 %v65
    %127 = vmatpush.msra.mxu0 %v64
    %128 = vmatpush.msra.mxu0 %v63
    %129 = vmatpush.msra.mxu0 %v62
    %130 = vmatpush.msra.mxu0 %v61
    %131 = vmatmul.f32.gmra.mxu0 %v114
    %v132 = vpop.f32.mrf.mxu0
    %v133 = vadd.f32 0.0, %v132
    %134 = vdwg.mxu0
    %v135 = vmul.f32 %v133, 0.03125
    %v136 = vadd.f32 %v135, 1e-06
    %v137 = vrsqrt.pop %v136
    %v138 = vmul.f32 %v137, %v136
    %v139 = vmul.f32 %v138, %v137
    %v140 = vmul.f32 0.5, %v139
    %v141 = vsub.f32 1.5, %v140
    %v142 = vmul.f32 %v137, %v141
    %vm143 = vweird.f32 %v136
    %vm144 = vweird.f32 %v137
    %vm145 = vmor %vm143, %vm144
    %v146 = vsel %vm145, %v137, %v142
    %v147 = vmul.f32 %v78, %v113
    %v148 = vpack.c.bf16 %v147, %v147
    %149 = vst [vmem:[#allocation8] sm:$0xf] %v148
    %v150 = vmul.f32 %v80, %v146
    %v151 = vpack.c.bf16 %v150, %v150
    %152 = vst [vmem:[#allocation9] sm:$0xf] %v151
    // Predicated region
    $region26: #{tpu_custom_call.1} parent=1 // pred_check
      _
    $region27: #{tpu_custom_call.1} parent=1 // pred_check_branch
      %154 = sbr.rel (0) target = $region29
    $region28: #{tpu_custom_call.1} parent=1 // pred_region
      %156 = vsyncadd [#allocation4], 0
      %s158 = sshll.u32 [#allocation8], 4
      %s159 = int_to_ptr.vmem [resolvable:$true] %s158
      %s160 = sshll.u32 %s3, 4
      %s161 = int_to_ptr.hbm [resolvable:$true] %s160
      %163 = dma.vmem_to_hbm [thread:$0]  %s159, 64, %s161, [#allocation4]
    $region29: #{tpu_custom_call.1} parent=1 // pred_fallthru
      _
    // Predicated region
    $region30: #{tpu_custom_call.1} parent=1 // pred_check
      _
    $region31: #{tpu_custom_call.1} parent=1 // pred_check_branch
      %165 = sbr.rel (0) target = $region33
    $region32: #{tpu_custom_call.1} parent=1 // pred_region
      %167 = vsyncadd [#allocation10], 0
      %s169 = sshll.u32 [#allocation9], 4
      %s170 = int_to_ptr.vmem [resolvable:$true] %s169
      %s171 = sshll.u32 %s4, 4
      %s172 = int_to_ptr.hbm [resolvable:$true] %s171
      %174 = dma.vmem_to_hbm [thread:$0]  %s170, 64, %s172, [#allocation10]
    $region33: #{tpu_custom_call.1} parent=1 // pred_fallthru
      _
    // Predicated region
    $region34: #{tpu_custom_call.1} parent=1 // pred_check
      _
    $region35: #{tpu_custom_call.1} parent=1 // pred_check_branch
      %176 = sbr.rel (0) target = $region37
    $region36: #{tpu_custom_call.1} parent=1 // pred_region
      %178 = dma.done [#allocation4], 64
    $region37: #{tpu_custom_call.1} parent=1 // pred_fallthru
      _
    // Predicated region
    $region38: #{tpu_custom_call.1} parent=1 // pred_check
      _
    $region39: #{tpu_custom_call.1} parent=1 // pred_check_branch
      %180 = sbr.rel (0) target = $region41
    $region40: #{tpu_custom_call.1} parent=1 // pred_region
      %182 = dma.done [#allocation10], 64
    $region41: #{tpu_custom_call.1} parent=1 // pred_fallthru
      _
    %183 = vsyncpa [#allocation3], 1
    %184 = vsyncpa [#allocation6], 1
    %185 = vsyncpa [#allocation4], 1
    %186 = vsyncpa [#allocation10], 1

</llo_original>
